<compile_context>
chip_gen: v7x
topology: tpu7x:2x2x1
jax: 0.10.0
libtpu: 0.0.40
codegen_flags: <defaults>
</compile_context>

<pallas_src>
import math

import numpy as np
import jax
import jax.numpy as jnp
from jax import lax
from jax.experimental import pallas as pl
from jax.experimental.pallas import tpu as pltpu

_LANE = 128
_SUBLANE = 8
_TARGET_LANES = 512            # past the knee of the DMA-efficiency curve
_TARGET_BLOCK_BYTES = 1 << 20  # ~1 MiB/block; (in+out) x double-buffer ~ 4 MiB VMEM


def _make_groupsort_kernel(P: int, is_float: bool, compute_dtype):
    """Sorts every contiguous P-wide lane chunk of the (TR, F') block ascending."""
    pow2 = P >= 2 and (P & (P - 1)) == 0

    def _cmp_exchange(x, partner, keep_min):
        if is_float:
            # NaN acts as +inf: consistent total order -> NaNs end up last.
            cond = (x > partner) | jnp.isnan(x)
        else:
            cond = x > partner
        mn = jnp.where(cond, partner, x)
        mx = jnp.where(cond, x, partner)
        return jnp.where(keep_min, mn, mx)

    def kernel(x_ref, o_ref):
        x = x_ref[...]                                      # (TR, F')
        if compute_dtype is not None:
            # Narrow dtypes: exact widening; keeps rotates/compares on 32-bit path.
            x = x.astype(compute_dtype)
        fp = x.shape[-1]
        ax_last = x.ndim - 1
        lane = lax.broadcasted_iota(jnp.int32, x.shape, ax_last)
        pos = lane % P                                      # index within a group

        if pow2:
            # Batcher bitonic sorting network: O(log^2 P) stages.
            # Masks stay within each P-chunk, so the roll wrap-around is harmless.
            k = 2
            while k <= P:
                j = k // 2
                while j >= 1:
                    nxt = pltpu.roll(x, fp - j, axis=ax_last)   # nxt[l] = x[l + j]
                    prv = pltpu.roll(x, j, axis=ax_last)        # prv[l] = x[l - j]
                    is_lower = (pos & j) == 0                   # pos ^ j == pos + j
                    ascending = (pos & k) == 0                  # merge direction
                    keep_min = is_lower == ascending
                    partner = jnp.where(is_lower, nxt, prv)
                    x = _cmp_exchange(x, partner, keep_min)
                    j //= 2
                k *= 2
        else:
            # Odd-even transposition fallback (non-power-of-two P, always >= 3 here).
            not_last = pos < (P - 1)
            odd = (pos % 2) == 1
            # Parity masks, hoisted (JAX does not CSE broadcasts inside the loop).
            low_even, up_even = (~odd) & not_last, odd
            low_odd, up_odd = odd & not_last, (~odd) & (pos > 0)
            for p in range(P):
                is_low, is_up = (low_even, up_even) if p % 2 == 0 else (low_odd, up_odd)
                nxt = pltpu.roll(x, fp - 1, axis=ax_last)   # nxt[l] = x[l + 1]
                prv = pltpu.roll(x, 1, axis=ax_last)        # prv[l] = x[l - 1]
                if is_float:
                    lo = jnp.where((x > nxt) | jnp.isnan(x), nxt, x)
                    hi = jnp.where((prv > x) | jnp.isnan(prv), prv, x)
                else:
                    lo = jnp.minimum(x, nxt)
                    hi = jnp.maximum(prv, x)
                x = jnp.where(is_low, lo, jnp.where(is_up, hi, x))

        o_ref[...] = x.astype(o_ref.dtype)

    return kernel


def _round_up(a: int, b: int) -> int:
    return -(-a // b) * b


def _fold_factor(F: int, itemsize: int) -> int:
    """How many rows to fold into one lane-row so the lane dim is wide & 128-aligned."""
    if F % _LANE == 0 and F >= _TARGET_LANES:
        return 1
    k = math.lcm(F, _LANE) // F
    if k * F < _TARGET_LANES:
        k *= max(1, _TARGET_LANES // (k * F))
    if k * F * itemsize > _TARGET_BLOCK_BYTES // _SUBLANE:  # keep folded rows modest
        return 1
    return k


def group_sort_pallas(x: jax.Array, n_groups: int, axis: int = -1) -> jax.Array:
    """Pallas-TPU implementation of MonotonicNetworks GroupSort.forward."""
    if x.shape[0] == 0:
        return x

    ax = axis if axis >= 0 else axis + x.ndim
    moved = ax != x.ndim - 1
    xm = jnp.moveaxis(x, ax, -1) if moved else x

    F = xm.shape[-1]
    if F % n_groups:
        raise ValueError(
            f"number of features({F}) needs to be a multiple of n_groups({n_groups})"
        )
    P = F // n_groups
    if P <= 1 or xm.size == 0:          # 1-element groups / empty tensor: identity
        return x

    dtype = xm.dtype
    is_float = bool(jnp.issubdtype(dtype, jnp.floating))
    itemsize = int(np.dtype(dtype).itemsize)
    compute_dtype = None
    if itemsize < 4:
        compute_dtype = jnp.float32 if is_float else jnp.int32
    eff_item = max(itemsize, 4)         # in-kernel working set is 32-bit for narrow dtypes

    R = int(np.prod(xm.shape[:-1], dtype=np.int64))
    x2 = xm.reshape(R, F)

    # Fold k rows into one lane-row (contiguous reshape: no transpose; groups stay
    # contiguous P-chunks along lanes and never straddle a fold boundary).
    k = _fold_factor(F, eff_item)
    Fp = k * F
    R2 = _round_up(R, k) // k           # folded row count

    # Row tile: ~1 MiB of 32-bit working set per block, multiple of 8 sublanes
    # (or the whole array).
    tr_cap = max(_SUBLANE,
                 (_TARGET_BLOCK_BYTES // (Fp * eff_item)) // _SUBLANE * _SUBLANE)
    if R2 <= tr_cap:
        TR, R2p = R2, R2
    else:
        TR = tr_cap
        R2p = _round_up(R2, TR)

    pad_rows = R2p * k - R              # padded rows form their own groups, discarded
    if pad_rows:
        x2 = jnp.pad(x2, ((0, pad_rows), (0, 0)))
    xf = x2.reshape(R2p, Fp)

    out = pl.pallas_call(
        _make_groupsort_kernel(P, is_float, compute_dtype),
        out_shape=jax.ShapeDtypeStruct((R2p, Fp), dtype),
        grid=(R2p // TR,),
        in_specs=[pl.BlockSpec((TR, Fp), lambda i: (i, 0))],
        out_specs=pl.BlockSpec((TR, Fp), lambda i: (i, 0)),
        compiler_params=pltpu.CompilerParams(
            dimension_semantics=("parallel",),   # v7x: shard row tiles over both TCs
        ),
    )(xf)

    res = out.reshape(R2p * k, F)[:R].reshape(xm.shape)
    if moved:
        res = jnp.moveaxis(res, -1, ax)
    return res


class GroupSort:
    """Mirror of the PyTorch module (no parameters)."""

    def __init__(self, n_groups: int, axis: int = -1):
        self.n_groups = n_groups
        self.axis = axis

    def __call__(self, x):
        return group_sort_pallas(x, self.n_groups, self.axis)


def _reference(x, n_groups, axis=-1):
    ax = axis if axis >= 0 else axis + x.ndim
    xm = jnp.moveaxis(x, ax, -1) if ax != x.ndim - 1 else x
    F = xm.shape[-1]
    P = F // n_groups
    s = jnp.sort(xm.reshape(xm.shape[:-1] + (n_groups, P)), axis=-1).reshape(xm.shape)
    return jnp.moveaxis(s, -1, ax) if ax != x.ndim - 1 else s


if __name__ == "__main__":
    key = jax.random.PRNGKey(0)
    k1, k2, k3, k4, k5, k6 = jax.random.split(key, 6)

    # 1) NCHW-like activation: 16 features -> 4 groups of 4 (folded-lane, bitonic).
    x1 = jax.random.normal(k1, (2, 4, 16, 16), dtype=jnp.float32)
    mod = GroupSort(n_groups=4)
    o1 = jax.block_until_ready(mod(x1))
    assert o1.shape == x1.shape and o1.dtype == x1.dtype
    np.testing.assert_allclose(np.asarray(o1), np.asarray(_reference(x1, 4)),
                               rtol=0, atol=0)

    # 2) Wider features: 256 features -> 8 groups of 32 (bitonic, 15 stages).
    x2 = jax.random.normal(k2, (4, 8, 256), dtype=jnp.float32)
    o2 = jax.block_until_ready(GroupSort(n_groups=8)(x2))
    np.testing.assert_allclose(np.asarray(o2), np.asarray(_reference(x2, 8)),
                               rtol=0, atol=0)

    # 3) Multi-tile grid with ragged row padding.
    x3 = jax.random.normal(k3, (4100, 64), dtype=jnp.float32)
    o3 = jax.block_until_ready(GroupSort(n_groups=16)(x3))
    np.testing.assert_allclose(np.asarray(o3), np.asarray(_reference(x3, 16)),
                               rtol=0, atol=0)

    # 4) NaNs sort to the end of their group (torch / numpy semantics).
    x4 = x1.at[0, 0, 0, 1].set(jnp.nan).at[1, 2, 3, 9].set(jnp.nan)
    o4 = jax.block_until_ready(mod(x4))
    np.testing.assert_allclose(np.asarray(o4), np.asarray(_reference(x4, 4)),
                               rtol=0, atol=0)

    # 5) bfloat16: exercises the in-kernel 32-bit widening path.
    x5 = jax.random.normal(k4, (2, 3, 64), dtype=jnp.bfloat16)
    o5 = jax.block_until_ready(GroupSort(n_groups=8)(x5))
    np.testing.assert_array_equal(np.asarray(o5, dtype=np.float32),
                                  np.asarray(_reference(x5, 8), dtype=np.float32))

    # 6) int32 with non-power-of-two group size (P=6): odd-even fallback, integer path.
    x6 = jax.random.randint(k5, (64, 48), 0, 1000, dtype=jnp.int32)
    o6 = jax.block_until_ready(GroupSort(n_groups=8)(x6))
    np.testing.assert_array_equal(np.asarray(o6), np.asarray(_reference(x6, 8)))

    # 7) Sorting along a non-last axis.
    x7 = jax.random.normal(k6, (2, 12, 5), dtype=jnp.float32)
    o7 = jax.block_until_ready(GroupSort(n_groups=3, axis=1)(x7))
    np.testing.assert_allclose(np.asarray(o7), np.asarray(_reference(x7, 3, axis=1)),
                               rtol=0, atol=0)

    print("KERNEL_OK")
</pallas_src>

<mosaic_0001>
module attributes {stable_mosaic.version = 11 : i64} {
  func.func @kernel(%arg0: i32, %arg1: memref<4x512xf32, #tpu.memory_space<vmem>>, %arg2: memref<4x512xf32, #tpu.memory_space<vmem>>) attributes {dimension_semantics = [#tpu.dimension_semantics<parallel>], iteration_bounds = array<i64: 1>, scalar_prefetch = 0 : i64, scratch_operands = 0 : i64, tpu.core_type = #tpu.core_type<tc>, window_params = [{transform_indices = @transform_0, window_bounds = array<i64: 4, 512>}, {transform_indices = @transform_1, window_bounds = array<i64: 4, 512>}]} {
    %c0 = arith.constant 0 : index
    %c0_0 = arith.constant 0 : index
    %0 = vector.load %arg1[%c0, %c0_0] : memref<4x512xf32, #tpu.memory_space<vmem>>, vector<4x512xf32>
    %1 = tpu.iota {dimensions = array<i32: 1>} : vector<4x512xi32>
    %c4_i32 = arith.constant 4 : i32
    %c0_i32 = arith.constant 0 : i32
    %2 = arith.cmpi eq, %c4_i32, %c0_i32 : i32
    %c1_i32 = arith.constant 1 : i32
    %3 = arith.select %2, %c1_i32, %c4_i32 : i32
    %4 = vector.broadcast %3 : i32 to vector<4x512xi32>
    %5 = arith.remsi %1, %4 : vector<4x512xi32>
    %c0_i32_1 = arith.constant 0 : i32
    %6 = vector.broadcast %c0_i32_1 : i32 to vector<4x512xi32>
    %7 = arith.cmpi ne, %5, %6 : vector<4x512xi32>
    %c0_i32_2 = arith.constant 0 : i32
    %8 = vector.broadcast %c0_i32_2 : i32 to vector<4x512xi32>
    %9 = arith.cmpi slt, %5, %8 : vector<4x512xi32>
    %c0_i32_3 = arith.constant 0 : i32
    %10 = arith.cmpi slt, %3, %c0_i32_3 : i32
    %11 = vector.broadcast %10 : i1 to vector<4x512xi1>
    %12 = vector.broadcast %11 : vector<4x512xi1> to vector<4x512xi1>
    %13 = arith.xori %9, %12 : vector<4x512xi1>
    %14 = arith.andi %13, %7 : vector<4x512xi1>
    %15 = vector.broadcast %3 : i32 to vector<4x512xi32>
    %16 = arith.addi %5, %15 : vector<4x512xi32>
    %17 = arith.select %14, %16, %5 : vector<4x512xi1>, vector<4x512xi32>
    %c511_i32 = arith.constant 511 : i32
    %18 = tpu.dynamic_rotate %0 by %c511_i32 dim 1 : vector<4x512xf32>, i32 -> vector<4x512xf32>
    %c1_i32_4 = arith.constant 1 : i32
    %19 = tpu.dynamic_rotate %0 by %c1_i32_4 dim 1 : vector<4x512xf32>, i32 -> vector<4x512xf32>
    %c1_i32_5 = arith.constant 1 : i32
    %20 = vector.broadcast %c1_i32_5 : i32 to vector<4x512xi32>
    %21 = arith.andi %17, %20 : vector<4x512xi32>
    %c0_i32_6 = arith.constant 0 : i32
    %22 = vector.broadcast %c0_i32_6 : i32 to vector<4x512xi32>
    %23 = arith.cmpi eq, %21, %22 : vector<4x512xi32>
    %c2_i32 = arith.constant 2 : i32
    %24 = vector.broadcast %c2_i32 : i32 to vector<4x512xi32>
    %25 = arith.andi %17, %24 : vector<4x512xi32>
    %c0_i32_7 = arith.constant 0 : i32
    %26 = vector.broadcast %c0_i32_7 : i32 to vector<4x512xi32>
    %27 = arith.cmpi eq, %25, %26 : vector<4x512xi32>
    %28 = arith.xori %23, %27 : vector<4x512xi1>
    %cst = arith.constant dense<true> : vector<4x512xi1>
    %29 = arith.xori %28, %cst : vector<4x512xi1>
    %30 = arith.select %23, %18, %19 : vector<4x512xi1>, vector<4x512xf32>
    %31 = arith.cmpf ogt, %0, %30 : vector<4x512xf32>
    %32 = arith.cmpf one, %0, %0 : vector<4x512xf32>
    %33 = arith.ori %31, %32 : vector<4x512xi1>
    %34 = arith.select %33, %30, %0 : vector<4x512xi1>, vector<4x512xf32>
    %35 = arith.select %33, %0, %30 : vector<4x512xi1>, vector<4x512xf32>
    %36 = arith.select %29, %34, %35 : vector<4x512xi1>, vector<4x512xf32>
    %c510_i32 = arith.constant 510 : i32
    %37 = tpu.dynamic_rotate %36 by %c510_i32 dim 1 : vector<4x512xf32>, i32 -> vector<4x512xf32>
    %c2_i32_8 = arith.constant 2 : i32
    %38 = tpu.dynamic_rotate %36 by %c2_i32_8 dim 1 : vector<4x512xf32>, i32 -> vector<4x512xf32>
    %c2_i32_9 = arith.constant 2 : i32
    %39 = vector.broadcast %c2_i32_9 : i32 to vector<4x512xi32>
    %40 = arith.andi %17, %39 : vector<4x512xi32>
    %c0_i32_10 = arith.constant 0 : i32
    %41 = vector.broadcast %c0_i32_10 : i32 to vector<4x512xi32>
    %42 = arith.cmpi eq, %40, %41 : vector<4x512xi32>
    %c4_i32_11 = arith.constant 4 : i32
    %43 = vector.broadcast %c4_i32_11 : i32 to vector<4x512xi32>
    %44 = arith.andi %17, %43 : vector<4x512xi32>
    %c0_i32_12 = arith.constant 0 : i32
    %45 = vector.broadcast %c0_i32_12 : i32 to vector<4x512xi32>
    %46 = arith.cmpi eq, %44, %45 : vector<4x512xi32>
    %47 = arith.xori %42, %46 : vector<4x512xi1>
    %cst_13 = arith.constant dense<true> : vector<4x512xi1>
    %48 = arith.xori %47, %cst_13 : vector<4x512xi1>
    %49 = arith.select %42, %37, %38 : vector<4x512xi1>, vector<4x512xf32>
    %50 = arith.cmpf ogt, %36, %49 : vector<4x512xf32>
    %51 = arith.cmpf one, %36, %36 : vector<4x512xf32>
    %52 = arith.ori %50, %51 : vector<4x512xi1>
    %53 = arith.select %52, %49, %36 : vector<4x512xi1>, vector<4x512xf32>
    %54 = arith.select %52, %36, %49 : vector<4x512xi1>, vector<4x512xf32>
    %55 = arith.select %48, %53, %54 : vector<4x512xi1>, vector<4x512xf32>
    %c511_i32_14 = arith.constant 511 : i32
    %56 = tpu.dynamic_rotate %55 by %c511_i32_14 dim 1 : vector<4x512xf32>, i32 -> vector<4x512xf32>
    %c1_i32_15 = arith.constant 1 : i32
    %57 = tpu.dynamic_rotate %55 by %c1_i32_15 dim 1 : vector<4x512xf32>, i32 -> vector<4x512xf32>
    %c1_i32_16 = arith.constant 1 : i32
    %58 = vector.broadcast %c1_i32_16 : i32 to vector<4x512xi32>
    %59 = arith.andi %17, %58 : vector<4x512xi32>
    %c0_i32_17 = arith.constant 0 : i32
    %60 = vector.broadcast %c0_i32_17 : i32 to vector<4x512xi32>
    %61 = arith.cmpi eq, %59, %60 : vector<4x512xi32>
    %c4_i32_18 = arith.constant 4 : i32
    %62 = vector.broadcast %c4_i32_18 : i32 to vector<4x512xi32>
    %63 = arith.andi %17, %62 : vector<4x512xi32>
    %c0_i32_19 = arith.constant 0 : i32
    %64 = vector.broadcast %c0_i32_19 : i32 to vector<4x512xi32>
    %65 = arith.cmpi eq, %63, %64 : vector<4x512xi32>
    %66 = arith.xori %61, %65 : vector<4x512xi1>
    %cst_20 = arith.constant dense<true> : vector<4x512xi1>
    %67 = arith.xori %66, %cst_20 : vector<4x512xi1>
    %68 = arith.select %61, %56, %57 : vector<4x512xi1>, vector<4x512xf32>
    %69 = arith.cmpf ogt, %55, %68 : vector<4x512xf32>
    %70 = arith.cmpf one, %55, %55 : vector<4x512xf32>
    %71 = arith.ori %69, %70 : vector<4x512xi1>
    %72 = arith.select %71, %68, %55 : vector<4x512xi1>, vector<4x512xf32>
    %73 = arith.select %71, %55, %68 : vector<4x512xi1>, vector<4x512xf32>
    %74 = arith.select %67, %72, %73 : vector<4x512xi1>, vector<4x512xf32>
    %c0_21 = arith.constant 0 : index
    %c0_22 = arith.constant 0 : index
    %75 = vector.load %arg2[%c0_21, %c0_22] : memref<4x512xf32, #tpu.memory_space<vmem>>, vector<4x512xf32>
    tpu.vector_store %arg2[%c0_21, %c0_22], %74 {strides = array<i32>} : memref<4x512xf32, #tpu.memory_space<vmem>>, vector<4x512xf32>,
    return
  }
  func.func @transform_0(%arg0: i32) -> (i32, i32) {
    %c0_i32 = arith.constant 0 : i32
    %c0_i32_0 = arith.constant 0 : i32
    return %arg0, %c0_i32 : i32, i32
  }
  func.func @transform_1(%arg0: i32) -> (i32, i32) {
    %c0_i32 = arith.constant 0 : i32
    %c0_i32_0 = arith.constant 0 : i32
    return %arg0, %c0_i32 : i32, i32
  }
}

</mosaic_0001>

<llo_original>
// kernel: tpu_custom_call.1
$region0: #{tpu_custom_call.1}
  #allocation0 [shape = 'u32[]', space=smem, size = 0x4, offset = 0x4, fixed_abs, tag = 'smem constant byte address 0x4 - core index']
  #allocation1 [shape = 'u32[144,128]{1,0:T(1,128)}', space=vmem, size = 0x12000, scoped, tag = 'internal scratch']
  %s0 = inlined_call_operand.hbm [shape: f32[4,512], index: 0, kind: input, shape index: {}]
  %s1 = inlined_call_operand.hbm [shape: f32[4,512], index: 1, kind: output, shape index: {}]
  %s2 = sld [smem:[#allocation0]]
  $region18: #{tpu_custom_call.1} parent=0
    _
  %s4 = ssub.s32 1, %s2
  %s5 = scalar_select 0, %s4, %s2
  $region1: #{tpu_custom_call.1} parent=0
    #allocation2 [shape = 'u8[8192]{0}', space=vmem, size = 0x2000, scoped, tag = 'input window, operand 0, single buffered']
    #allocation3 [shape = 's32[1]{0}', space=sflag, size = 0x4, scoped, tag = 'scoped memory for tpu_custom_call.1']
    #allocation4 [shape = 's32[1]{0}', space=sflag, size = 0x4, scoped, tag = 'scoped memory for tpu_custom_call.1']
    #allocation5 [shape = 'u8[8192]{0}', space=vmem, size = 0x2000, scoped, tag = 'output window, operand 0, single buffered']
    %6 = vsyncpa [#allocation3], 0
    %7 = vsyncpa [#allocation4], 0
    // Predicated region
    $region2: #{tpu_custom_call.1} parent=1 // pred_check
      _
    $region3: #{tpu_custom_call.1} parent=1 // pred_check_branch
      %9 = sbr.rel (0) target = $region5
    $region4: #{tpu_custom_call.1} parent=1 // pred_region
      %s11 = ssub.s32 256, 256
      %12 = vsyncadd [#allocation3], %s11
      %s14 = sshll.u32 [#allocation2], 4
      %s15 = int_to_ptr.vmem [resolvable:$true] %s14
      %17 = dma.hbm_to_vmem [thread:$0]  %s0, 256, %s15, [#allocation3]
    $region5: #{tpu_custom_call.1} parent=1 // pred_fallthru
      _
    // Predicated region
    $region6: #{tpu_custom_call.1} parent=1 // pred_check
      _
    $region7: #{tpu_custom_call.1} parent=1 // pred_check_branch
      %19 = sbr.rel (0) target = $region9
    $region8: #{tpu_custom_call.1} parent=1 // pred_region
      %20 = dma.done [#allocation3], 256
    $region9: #{tpu_custom_call.1} parent=1 // pred_fallthru
      _
    %v21 = vld [vmem:[#allocation2] sm:$0xff]
    %v22 = vld [vmem:[#allocation2 + $0x8] sm:$0xff]
    %v23 = vlaneseq
    %v24 = vand.u32 %v23, 127
    %v25 = vadd.s32 %v24, 128
    %v26 = vadd.s32 %v24, 256
    %v27 = vadd.s32 %v24, 384
    %vm28 = vcmp.lt.s32.totalorder %v24, 0
    %v29 = vsub.s32 0, %v24
    %v30 = vsel %vm28, %v29, %v24
    %v31 = vshrl.u32 %v30, 2
    %v32 = vand.u32 %v30, 3
    %v33 = vsub.s32 0, %v32
    %v34 = vsel %vm28, %v33, %v32
    %vm35 = vcmp.lt.s32.totalorder %v25, 0
    %v36 = vsub.s32 0, %v25
    %v37 = vsel %vm35, %v36, %v25
    %v38 = vshrl.u32 %v37, 2
    %v39 = vand.u32 %v37, 3
    %v40 = vsub.s32 0, %v39
    %v41 = vsel %vm35, %v40, %v39
    %vm42 = vcmp.lt.s32.totalorder %v26, 0
    %v43 = vsub.s32 0, %v26
    %v44 = vsel %vm42, %v43, %v26
    %v45 = vshrl.u32 %v44, 2
    %v46 = vand.u32 %v44, 3
    %v47 = vsub.s32 0, %v46
    %v48 = vsel %vm42, %v47, %v46
    %vm49 = vcmp.lt.s32.totalorder %v27, 0
    %v50 = vsub.s32 0, %v27
    %v51 = vsel %vm49, %v50, %v27
    %v52 = vshrl.u32 %v51, 2
    %v53 = vand.u32 %v51, 3
    %v54 = vsub.s32 0, %v53
    %v55 = vsel %vm49, %v54, %v53
    %vm56 = vcmp.ne.s32.totalorder %v34, 0
    %vm57 = vcmp.ne.s32.totalorder %v41, 0
    %vm58 = vcmp.ne.s32.totalorder %v48, 0
    %vm59 = vcmp.ne.s32.totalorder %v55, 0
    %vm60 = vcmp.lt.s32.totalorder %v34, 0
    %vm61 = vcmp.lt.s32.totalorder %v41, 0
    %vm62 = vcmp.lt.s32.totalorder %v48, 0
    %vm63 = vcmp.lt.s32.totalorder %v55, 0
    %vm64 = vmand %vm60, %vm56
    %vm65 = vmand %vm61, %vm57
    %vm66 = vmand %vm62, %vm58
    %vm67 = vmand %vm63, %vm59
    %v68 = vadd.s32 %v34, 4
    %v69 = vadd.s32 %v41, 4
    %v70 = vadd.s32 %v48, 4
    %v71 = vadd.s32 %v55, 4
    %v72 = vsel %vm64, %v68, %v34
    %v73 = vsel %vm65, %v69, %v41
    %v74 = vsel %vm66, %v70, %v48
    %v75 = vsel %vm67, %v71, %v55
    %v78 = vcombine.high %v21, %v21
    %v79 = vcombine.high %v22, %v22
    %82 = vrot.lane.b32.xlu0 %v21, 127
    %v83 = vpop.permute.xlu0 %82
    %84 = vrot.lane.b32.xlu0 %v78, 127
    %v85 = vpop.permute.xlu0 %84
    %86 = vrot.lane.b32.xlu0 %v22, 127
    %v87 = vpop.permute.xlu0 %86
    %88 = vrot.lane.b32.xlu0 %v79, 127
    %v89 = vpop.permute.xlu0 %88
    %vm90 = vcmp.lt.s32.totalorder %v24, 127
    %v91 = vsel %vm90, %v87, %v89
    %v92 = vsel %vm90, %v85, %v87
    %v93 = vsel %vm90, %v83, %v85
    %v94 = vsel %vm90, %v89, %v83
    %95 = vrot.lane.b32.xlu0 %v21, 1
    %v96 = vpop.permute.xlu0 %95
    %97 = vrot.lane.b32.xlu0 %v78, 1
    %v98 = vpop.permute.xlu0 %97
    %99 = vrot.lane.b32.xlu0 %v22, 1
    %v100 = vpop.permute.xlu0 %99
    %101 = vrot.lane.b32.xlu0 %v79, 1
    %v102 = vpop.permute.xlu0 %101
    %vm103 = vcmp.lt.s32.totalorder %v24, 1
    %v104 = vsel %vm103, %v100, %v102
    %v105 = vsel %vm103, %v98, %v100
    %v106 = vsel %vm103, %v96, %v98
    %v107 = vsel %vm103, %v102, %v96
    %v108 = vand.u32 %v72, 1
    %v109 = vand.u32 %v73, 1
    %v110 = vand.u32 %v74, 1
    %v111 = vand.u32 %v75, 1
    %vm112 = vcmp.eq.s32.totalorder %v108, 0
    %vm113 = vcmp.eq.s32.totalorder %v109, 0
    %vm114 = vcmp.eq.s32.totalorder %v110, 0
    %vm115 = vcmp.eq.s32.totalorder %v111, 0
    %v116 = vand.u32 %v72, 2
    %v117 = vand.u32 %v73, 2
    %v118 = vand.u32 %v74, 2
    %v119 = vand.u32 %v75, 2
    %vm120 = vcmp.eq.s32.totalorder %v116, 0
    %vm121 = vcmp.eq.s32.totalorder %v117, 0
    %vm122 = vcmp.eq.s32.totalorder %v118, 0
    %vm123 = vcmp.eq.s32.totalorder %v119, 0
    %vm124 = vmxor %vm112, %vm120
    %vm125 = vmxor %vm113, %vm121
    %vm126 = vmxor %vm114, %vm122
    %vm127 = vmxor %vm115, %vm123
    %vm128 = vmxor %vm124, 1
    %vm129 = vmxor %vm125, 1
    %vm130 = vmxor %vm126, 1
    %vm131 = vmxor %vm127, 1
    %v132 = vsel %vm112, %v93, %v107
    %v133 = vsel %vm113, %v92, %v106
    %v134 = vsel %vm114, %v91, %v105
    %v135 = vsel %vm115, %v94, %v104
    %v140 = vcombine.low %v132, %v133
    %v141 = vcombine.low %v134, %v135
    %vm144 = vcmp.gt.f32.partialorder %v21, %v140
    %vm145 = vcmp.gt.f32.partialorder %v22, %v141
    %vm146 = vcmp.ne.f32.partialorder %v21, %v21
    %vm147 = vcmp.ne.f32.partialorder %v22, %v22
    %vm148 = vmor %vm144, %vm146
    %vm149 = vmor %vm145, %vm147
    %v150 = vsel %vm148, %v140, %v21
    %v151 = vsel %vm149, %v141, %v22
    %v152 = vsel %vm148, %v21, %v140
    %v153 = vsel %vm149, %v22, %v141
    %v156 = vcombine.high %v150, %v150
    %v157 = vcombine.high %v151, %v151
    %v162 = vcombine.high %v152, %v152
    %v163 = vcombine.high %v153, %v153
    %v166 = vsel %vm128, %v150, %v152
    %v167 = vsel %vm129, %v156, %v162
    %v168 = vsel %vm130, %v151, %v153
    %v169 = vsel %vm131, %v157, %v163
    %170 = vrot.lane.b32.xlu0 %v166, 126
    %v171 = vpop.permute.xlu0 %170
    %172 = vrot.lane.b32.xlu0 %v167, 126
    %v173 = vpop.permute.xlu0 %172
    %174 = vrot.lane.b32.xlu0 %v168, 126
    %v175 = vpop.permute.xlu0 %174
    %176 = vrot.lane.b32.xlu0 %v169, 126
    %v177 = vpop.permute.xlu0 %176
    %vm178 = vcmp.lt.s32.totalorder %v24, 126
    %v179 = vsel %vm178, %v175, %v177
    %v180 = vsel %vm178, %v173, %v175
    %v181 = vsel %vm178, %v171, %v173
    %v182 = vsel %vm178, %v177, %v171
    %183 = vrot.lane.b32.xlu0 %v166, 2
    %v184 = vpop.permute.xlu0 %183
    %185 = vrot.lane.b32.xlu0 %v167, 2
    %v186 = vpop.permute.xlu0 %185
    %187 = vrot.lane.b32.xlu0 %v168, 2
    %v188 = vpop.permute.xlu0 %187
    %189 = vrot.lane.b32.xlu0 %v169, 2
    %v190 = vpop.permute.xlu0 %189
    %vm191 = vcmp.lt.s32.totalorder %v24, 2
    %v192 = vsel %vm191, %v188, %v190
    %v193 = vsel %vm191, %v186, %v188
    %v194 = vsel %vm191, %v184, %v186
    %v195 = vsel %vm191, %v190, %v184
    %v196 = vand.u32 %v72, 4
    %v197 = vand.u32 %v73, 4
    %v198 = vand.u32 %v74, 4
    %v199 = vand.u32 %v75, 4
    %vm200 = vcmp.eq.s32.totalorder %v196, 0
    %vm201 = vcmp.eq.s32.totalorder %v197, 0
    %vm202 = vcmp.eq.s32.totalorder %v198, 0
    %vm203 = vcmp.eq.s32.totalorder %v199, 0
    %vm204 = vmxor %vm120, %vm200
    %vm205 = vmxor %vm121, %vm201
    %vm206 = vmxor %vm122, %vm202
    %vm207 = vmxor %vm123, %vm203
    %vm208 = vmxor %vm204, 1
    %vm209 = vmxor %vm205, 1
    %vm210 = vmxor %vm206, 1
    %vm211 = vmxor %vm207, 1
    %v212 = vsel %vm120, %v181, %v195
    %v213 = vsel %vm121, %v180, %v194
    %v214 = vsel %vm122, %v179, %v193
    %v215 = vsel %vm123, %v182, %v192
    %vm216 = vcmp.gt.f32.partialorder %v166, %v212
    %vm217 = vcmp.gt.f32.partialorder %v167, %v213
    %vm218 = vcmp.gt.f32.partialorder %v168, %v214
    %vm219 = vcmp.gt.f32.partialorder %v169, %v215
    %vm220 = vcmp.ne.f32.partialorder %v166, %v166
    %vm221 = vcmp.ne.f32.partialorder %v167, %v167
    %vm222 = vcmp.ne.f32.partialorder %v168, %v168
    %vm223 = vcmp.ne.f32.partialorder %v169, %v169
    %vm224 = vmor %vm216, %vm220
    %vm225 = vmor %vm217, %vm221
    %vm226 = vmor %vm218, %vm222
    %vm227 = vmor %vm219, %vm223
    %v228 = vsel %vm224, %v212, %v166
    %v229 = vsel %vm225, %v213, %v167
    %v230 = vsel %vm226, %v214, %v168
    %v231 = vsel %vm227, %v215, %v169
    %v232 = vsel %vm224, %v166, %v212
    %v233 = vsel %vm225, %v167, %v213
    %v234 = vsel %vm226, %v168, %v214
    %v235 = vsel %vm227, %v169, %v215
    %v236 = vsel %vm208, %v228, %v232
    %v237 = vsel %vm209, %v229, %v233
    %v238 = vsel %vm210, %v230, %v234
    %v239 = vsel %vm211, %v231, %v235
    %240 = vrot.lane.b32.xlu0 %v236, 127
    %v241 = vpop.permute.xlu0 %240
    %242 = vrot.lane.b32.xlu0 %v237, 127
    %v243 = vpop.permute.xlu0 %242
    %244 = vrot.lane.b32.xlu0 %v238, 127
    %v245 = vpop.permute.xlu0 %244
    %246 = vrot.lane.b32.xlu0 %v239, 127
    %v247 = vpop.permute.xlu0 %246
    %v248 = vsel %vm90, %v245, %v247
    %v249 = vsel %vm90, %v243, %v245
    %v250 = vsel %vm90, %v241, %v243
    %v251 = vsel %vm90, %v247, %v241
    %252 = vrot.lane.b32.xlu0 %v236, 1
    %v253 = vpop.permute.xlu0 %252
    %254 = vrot.lane.b32.xlu0 %v237, 1
    %v255 = vpop.permute.xlu0 %254
    %256 = vrot.lane.b32.xlu0 %v238, 1
    %v257 = vpop.permute.xlu0 %256
    %258 = vrot.lane.b32.xlu0 %v239, 1
    %v259 = vpop.permute.xlu0 %258
    %v260 = vsel %vm103, %v257, %v259
    %v261 = vsel %vm103, %v255, %v257
    %v262 = vsel %vm103, %v253, %v255
    %v263 = vsel %vm103, %v259, %v253
    %vm264 = vmxor %vm112, %vm200
    %vm265 = vmxor %vm113, %vm201
    %vm266 = vmxor %vm114, %vm202
    %vm267 = vmxor %vm115, %vm203
    %vm268 = vmxor %vm264, 1
    %vm269 = vmxor %vm265, 1
    %vm270 = vmxor %vm266, 1
    %vm271 = vmxor %vm267, 1
    %v272 = vsel %vm112, %v250, %v263
    %v273 = vsel %vm113, %v249, %v262
    %v274 = vsel %vm114, %v248, %v261
    %v275 = vsel %vm115, %v251, %v260
    %vm276 = vcmp.gt.f32.partialorder %v236, %v272
    %vm277 = vcmp.gt.f32.partialorder %v237, %v273
    %vm278 = vcmp.gt.f32.partialorder %v238, %v274
    %vm279 = vcmp.gt.f32.partialorder %v239, %v275
    %vm280 = vcmp.ne.f32.partialorder %v236, %v236
    %vm281 = vcmp.ne.f32.partialorder %v237, %v237
    %vm282 = vcmp.ne.f32.partialorder %v238, %v238
    %vm283 = vcmp.ne.f32.partialorder %v239, %v239
    %vm284 = vmor %vm276, %vm280
    %vm285 = vmor %vm277, %vm281
    %vm286 = vmor %vm278, %vm282
    %vm287 = vmor %vm279, %vm283
    %v288 = vsel %vm284, %v272, %v236
    %v289 = vsel %vm285, %v273, %v237
    %v290 = vsel %vm286, %v274, %v238
    %v291 = vsel %vm287, %v275, %v239
    %v292 = vsel %vm284, %v236, %v272
    %v293 = vsel %vm285, %v237, %v273
    %v294 = vsel %vm286, %v238, %v274
    %v295 = vsel %vm287, %v239, %v275
    %v296 = vsel %vm268, %v288, %v292
    %v297 = vsel %vm269, %v289, %v293
    %v298 = vsel %vm270, %v290, %v294
    %v299 = vsel %vm271, %v291, %v295
    %v304 = vcombine.low %v296, %v297
    %v305 = vcombine.low %v298, %v299
    %308 = vst [vmem:[#allocation5] sm:$0xff] %v304
    %309 = vst [vmem:[#allocation5 + $0x8] sm:$0xff] %v305
    // Predicated region
    $region10: #{tpu_custom_call.1} parent=1 // pred_check
      _
    $region11: #{tpu_custom_call.1} parent=1 // pred_check_branch
      %311 = sbr.rel (0) target = $region13
    $region12: #{tpu_custom_call.1} parent=1 // pred_region
      %s313 = ssub.s32 256, 256
      %314 = vsyncadd [#allocation4], %s313
      %s316 = sshll.u32 [#allocation5], 4
      %s317 = int_to_ptr.vmem [resolvable:$true] %s316
      %319 = dma.vmem_to_hbm [thread:$0]  %s317, 256, %s1, [#allocation4]
    $region13: #{tpu_custom_call.1} parent=1 // pred_fallthru
      _
    // Predicated region
    $region14: #{tpu_custom_call.1} parent=1 // pred_check
      _
    $region15: #{tpu_custom_call.1} parent=1 // pred_check_branch
      %321 = sbr.rel (0) target = $region17
    $region16: #{tpu_custom_call.1} parent=1 // pred_region
      %322 = dma.done [#allocation4], 256
    $region17: #{tpu_custom_call.1} parent=1 // pred_fallthru
      _
    %323 = vsyncpa [#allocation3], 1
    %324 = vsyncpa [#allocation4], 1

</llo_original>
